<compile_context>
chip_gen: v6e
topology: v6e:2x2x1
jax: 0.10.0
libtpu: 0.0.40
codegen_flags: <defaults>
</compile_context>

<pallas_src>
import functools

import jax
import jax.numpy as jnp
from jax.experimental import pallas as pl
from jax.experimental.pallas import tpu as pltpu

EMB_DIM = 768     # bert-base-uncased hidden size
N_CLASSES = 3     # nn.Linear(768, 3)


def _round_up(x, m):
    return ((x + m - 1) // m) * m


def _sublane_pack(dtype):
    """Sublane packing multiple for the second-to-last tile dim."""
    itemsize = jnp.dtype(dtype).itemsize
    return max(8, 32 // itemsize)          # 8 for f32, 16 for bf16, 32 for int8/fp8


def _vmem_cap_bytes():
    """Per-generation scoped-VMEM ceiling (~3/4 of physical VMEM)."""
    try:
        return int(pltpu.get_tpu_info().vmem_capacity_bytes) * 3 // 4
    except Exception:
        return 48 << 20


def _softmax_rows(logits, n_classes, out_dtype):
    """Numerically-stable softmax over a tiny class axis.

    Uses explicit per-column max/add (pure VPU) instead of XLU cross-lane
    reduces on a 3/128-lane vreg.  approx reciprocal runs on the EUP slot;
    probabilities sum to 1 within ~1e-4 (fine for the 1e-2 tolerance here).
    """
    m = logits[:, 0:1]
    for i in range(1, n_classes):
        m = jnp.maximum(m, logits[:, i:i + 1])
    e = jnp.exp(logits - m)
    denom = e[:, 0:1]
    for i in range(1, n_classes):
        denom = denom + e[:, i:i + 1]
    return (e * pl.reciprocal(denom, approx=True)).astype(out_dtype)


# ----------------------------------------------------------------------------
# Path A: full-vocab probability table (use when B*S >= V or table is reused).
# ----------------------------------------------------------------------------
def _vocab_probs_kernel(emb_ref, w_ref, b_ref, o_ref):
    """One vocab-row tile: probs = softmax(emb @ W + b) over the class axis."""
    logits = jnp.dot(emb_ref[...], w_ref[...],
                     preferred_element_type=jnp.float32) + b_ref[...]
    o_ref[...] = _softmax_rows(logits, o_ref.shape[-1], o_ref.dtype)


def _table_path(emb_table, w, b2d, tile_rows, pack, itemsize):
    V, E = emb_table.shape
    C = w.shape[-1]

    # Even number of row tiles -> clean split across the 2 TensorCores on v7x;
    # tiles rounded to the dtype sublane-pack multiple; ragged last tile is
    # masked by Pallas (pl.cdiv grid).
    n_tiles = 2 * pl.cdiv(V, 2 * tile_rows)
    tile_v = max(pack, _round_up(pl.cdiv(V, n_tiles), pack))
    grid = (pl.cdiv(V, tile_v),)

    vmem_need = (2 * tile_v * E * itemsize          # emb tiles, double-buffered
                 + 2 * tile_v * C * 4               # output tiles
                 + 2 * (E * C * itemsize + C * 4))  # weight + bias
    vmem_limit = int(min(max(vmem_need + (8 << 20), 32 << 20), _vmem_cap_bytes()))

    cost = pl.CostEstimate(
        flops=2 * V * E * C,
        transcendentals=V * C,
        bytes_accessed=V * E * itemsize + V * C * 4 + E * C * itemsize)

    return pl.pallas_call(
        _vocab_probs_kernel,
        out_shape=jax.ShapeDtypeStruct((V, C), jnp.float32),
        grid_spec=pltpu.PrefetchScalarGridSpec(
            num_scalar_prefetch=0,
            grid=grid,
            in_specs=[
                pl.BlockSpec((tile_v, E), lambda i: (i, 0)),   # emb row tile
                pl.BlockSpec((E, C), lambda i: (0, 0)),        # full weight
                pl.BlockSpec((1, C), lambda i: (0, 0)),        # bias
            ],
            out_specs=pl.BlockSpec((tile_v, C), lambda i: (i, 0)),
        ),
        compiler_params=pltpu.CompilerParams(
            dimension_semantics=("parallel",),
            vmem_limit_bytes=vmem_limit),
        cost_estimate=cost,
    )(emb_table, w, b2d)


# ----------------------------------------------------------------------------
# Path B: token-driven gather-then-fuse (use when B*S < V).
# ----------------------------------------------------------------------------
def _make_token_probs_kernel(tile_t):
    def kernel(ids_ref, emb_hbm, w_ref, b_ref, o_ref, gbuf, sem):
        """One token tile: DMA-gather tile_t embedding rows, then fused
        matmul + bias + softmax.

        ids_ref: SMEM (N_pad,) int32   emb_hbm: HBM (V, E)
        w_ref: (E, C)   b_ref: (1, C)  o_ref: (tile_t, C)
        gbuf:  VMEM (tile_t, E)        sem: DMA semaphore (1,)
        """
        base = pl.program_id(0) * tile_t

        # Issue one row DMA per token, all on a shared byte-counting semaphore.
        @pl.loop(0, tile_t)
        def _issue(r):
            row = ids_ref[base + r]
            pltpu.make_async_copy(emb_hbm.at[pl.ds(row, 1), :],
                                  gbuf.at[pl.ds(r, 1), :],
                                  sem.at[0]).start()

        # Drain: tile_t equal-size waits fully decrement the shared semaphore.
        @pl.loop(0, tile_t)
        def _drain(r):
            pltpu.make_async_copy(emb_hbm.at[pl.ds(0, 1), :],
                                  gbuf.at[pl.ds(r, 1), :],
                                  sem.at[0]).wait()

        logits = jnp.dot(gbuf[...], w_ref[...],
                         preferred_element_type=jnp.float32) + b_ref[...]
        o_ref[...] = _softmax_rows(logits, o_ref.shape[-1], o_ref.dtype)

    return kernel


def _token_path(ids, emb_table, w, b2d, token_tile, pack, itemsize):
    V, E = emb_table.shape
    C = w.shape[-1]
    N = ids.shape[0]

    tile_t = min(_round_up(token_tile, pack), _round_up(N, pack))
    n_pad = _round_up(N, tile_t)
    if n_pad != N:
        ids = jnp.pad(ids, (0, n_pad - N))   # pad with row 0 (valid); sliced off
    grid = (n_pad // tile_t,)

    vmem_need = (tile_t * E * itemsize                 # gather buffer
                 + 2 * tile_t * C * 4                  # output tiles
                 + 2 * (E * C * itemsize + C * 4))     # weight + bias
    vmem_limit = int(min(max(vmem_need + (8 << 20), 32 << 20), _vmem_cap_bytes()))

    cost = pl.CostEstimate(
        flops=2 * n_pad * E * C,
        transcendentals=n_pad * C,
        bytes_accessed=(n_pad * E * itemsize + n_pad * C * 4
                        + E * C * itemsize + n_pad * 4))

    return pl.pallas_call(
        _make_token_probs_kernel(tile_t),
        out_shape=jax.ShapeDtypeStruct((n_pad, C), jnp.float32),
        grid_spec=pltpu.PrefetchScalarGridSpec(
            num_scalar_prefetch=1,                      # flattened ids -> SMEM
            grid=grid,
            in_specs=[
                pl.BlockSpec(memory_space=pl.ANY),              # table stays in HBM
                pl.BlockSpec((E, C), lambda i, ids_ref: (0, 0)),
                pl.BlockSpec((1, C), lambda i, ids_ref: (0, 0)),
            ],
            out_specs=pl.BlockSpec((tile_t, C), lambda i, ids_ref: (i, 0)),
            scratch_shapes=[
                pltpu.VMEM((tile_t, E), emb_table.dtype),
                pltpu.SemaphoreType.DMA((1,)),
            ],
        ),
        compiler_params=pltpu.CompilerParams(
            dimension_semantics=("parallel",),
            vmem_limit_bytes=vmem_limit),
        cost_estimate=cost,
    )(ids, emb_table, w, b2d)


# ----------------------------------------------------------------------------
# Wrapper
# ----------------------------------------------------------------------------
@functools.partial(jax.jit, static_argnames=("tile_rows", "token_tile", "path"))
def linear_classifier_forward(token_ids, emb_table, weight, bias, *,
                              tile_rows=2048, token_tile=256, path="auto"):
    """token_ids: [B,S] int; emb_table: [V,E] (f32 or pre-stored bf16);
    weight: [E,3]; bias: [3].  path in {"auto","tokens","table"}."""
    B, S = token_ids.shape
    V, E = emb_table.shape
    C = weight.shape[-1]
    N = B * S

    table_dtype = emb_table.dtype
    itemsize = jnp.dtype(table_dtype).itemsize
    pack = _sublane_pack(table_dtype)

    # The table is used in whatever dtype it is STORED in (cast once outside
    # jit for bf16); only the tiny (768,3) weight is matched so the MXU sees a
    # homogeneous-dtype matmul.  Softmax/accumulation stays f32.
    w = weight.astype(table_dtype)
    b2d = bias.reshape(1, C).astype(jnp.float32)

    if path == "auto":
        path = "tokens" if N < V else "table"

    ids = token_ids.astype(jnp.int32).reshape(-1)     # x.to(long); x.view(-1,·)

    if path == "tokens":
        out2d = _token_path(ids, emb_table, w, b2d, token_tile, pack, itemsize)[:N]
    else:
        probs_table = _table_path(emb_table, w, b2d, tile_rows, pack, itemsize)
        # TODO(synk): for B*S in the tens of thousands, fuse this 12 B/token
        # gather into a scalar-prefetch Pallas kernel; XLA handles it fine here.
        out2d = jnp.take(probs_table, ids, axis=0)    # [B*S, 3]

    return out2d.reshape(B, S, C)                     # x.view(batchsize, -1, 3)


def _reference_forward(token_ids, emb_table, weight, bias):
    """Pure-JAX reference matching the PyTorch module exactly (f32)."""
    x = jnp.take(emb_table.astype(jnp.float32), token_ids.astype(jnp.int32), axis=0)
    logits = jnp.einsum("bse,ec->bsc", x, weight) + bias
    return jax.nn.softmax(logits, axis=-1)


if __name__ == "__main__":
    key = jax.random.PRNGKey(0)
    k_ids, k_emb, k_w, k_b = jax.random.split(key, 4)

    # Small deterministic synthetic setup (no checkpoint loading).
    B, S = 2, 8            # batch=2, seq=8 -> 16 tokens
    VOCAB = 512            # synthetic vocab in place of bert's 30522

    token_ids = jax.random.randint(k_ids, (B, S), 0, VOCAB, dtype=jnp.int32)
    emb_table = jax.random.normal(k_emb, (VOCAB, EMB_DIM), dtype=jnp.float32) * 0.02
    # PyTorch nn.Linear(768, 3) weight is [3, 768]; we store its transpose.
    weight = jax.random.normal(k_w, (EMB_DIM, N_CLASSES), dtype=jnp.float32) * 0.02
    bias = jax.random.normal(k_b, (N_CLASSES,), dtype=jnp.float32) * 0.02

    ref = _reference_forward(token_ids, emb_table, weight, bias)

    # 1) auto path -> token-gather kernel (B*S=16 < V=512), f32 table.
    out = jax.block_until_ready(
        linear_classifier_forward(token_ids, emb_table, weight, bias))
    assert out.shape == (B, S, N_CLASSES)
    assert bool(jnp.allclose(jnp.sum(out, axis=-1), 1.0, atol=1e-2))
    assert bool(jnp.allclose(out, ref, atol=1e-2))

    # 2) bf16 table, cast ONCE outside jit (halves the dominant HBM stream).
    emb_table_bf16 = emb_table.astype(jnp.bfloat16)
    out_bf16 = jax.block_until_ready(
        linear_classifier_forward(token_ids, emb_table_bf16, weight, bias))
    assert bool(jnp.allclose(out_bf16, ref, atol=2e-2))

    # 3) forced full-vocab-table path (f32 and bf16), same semantics.
    out_tab = jax.block_until_ready(
        linear_classifier_forward(token_ids, emb_table, weight, bias, path="table"))
    assert bool(jnp.allclose(out_tab, ref, atol=1e-2))
    out_tab_bf16 = jax.block_until_ready(
        linear_classifier_forward(token_ids, emb_table_bf16, weight, bias,
                                  path="table"))
    assert bool(jnp.allclose(out_tab_bf16, ref, atol=2e-2))

    # 4) ragged vocab (V not a multiple of the tile): exercises pl.cdiv grid
    #    with a masked last block in the table path.
    V2 = 70
    ids2 = jax.random.randint(k_ids, (B, S), 0, V2, dtype=jnp.int32)
    emb2 = jax.random.normal(k_emb, (V2, EMB_DIM), dtype=jnp.float32) * 0.02
    ref2 = _reference_forward(ids2, emb2, weight, bias)
    out2 = jax.block_until_ready(
        linear_classifier_forward(ids2, emb2, weight, bias, path="table"))
    assert bool(jnp.allclose(out2, ref2, atol=1e-2))

    print("KERNEL_OK")
</pallas_src>

<mosaic_0001>
module attributes {stable_mosaic.version = 11 : i64} {
  func.func @kernel(%arg0: i32, %arg1: memref<16xi32, #tpu.memory_space<smem>>, %arg2: memref<512x768xf32, #tpu.memory_space<any>>, %arg3: memref<768x3xf32, #tpu.memory_space<vmem>>, %arg4: memref<1x3xf32, #tpu.memory_space<vmem>>, %arg5: memref<16x3xf32, #tpu.memory_space<vmem>>, %arg6: memref<16x768xf32, #tpu.memory_space<vmem>>, %arg7: memref<1x!tpu.dma_semaphore, #tpu.memory_space<semaphore_mem>>) attributes {dimension_semantics = [#tpu.dimension_semantics<parallel>], iteration_bounds = array<i64: 1>, scalar_prefetch = 1 : i64, scratch_operands = 2 : i64, tpu.core_type = #tpu.core_type<tc>, window_params = [{}, {pipeline_mode = #tpu.pipeline_mode<synchronous>, transform_indices = @transform_1, window_bounds = array<i64: 768, 3>}, {pipeline_mode = #tpu.pipeline_mode<synchronous>, transform_indices = @transform_2, window_bounds = array<i64: 1, 3>}, {transform_indices = @transform_3, window_bounds = array<i64: 16, 3>}]} {
    %c16_i32 = arith.constant 16 : i32
    %0 = arith.muli %arg0, %c16_i32 : i32
    %c0_i32 = arith.constant 0 : i32
    %c16_i32_0 = arith.constant 16 : i32
    %1 = arith.addi %c0_i32, %c16_i32_0 : i32
    %c1_i32 = arith.constant 1 : i32
    scf.for %arg8 = %c0_i32 to %1 step %c1_i32  : i32 {
      %c1_i32_13 = arith.constant 1 : i32
      %26 = arith.muli %arg8, %c1_i32_13 : i32
      %c0_i32_14 = arith.constant 0 : i32
      %27 = arith.addi %c0_i32_14, %26 : i32
      %28 = arith.addi %0, %27 : i32
      %29 = arith.index_cast %28 : i32 to index
      %30 = memref.load %arg1[%29] : memref<16xi32, #tpu.memory_space<smem>>
      %c0_i32_15 = arith.constant 0 : i32
      %c0_i32_16 = arith.constant 0 : i32
      %31 = tpu.memref_slice %arg2[%30, %c0_i32_16] : memref<512x768xf32, #tpu.memory_space<any>> -> memref<1x768xf32, #tpu.memory_space<any>>
      %c0_i32_17 = arith.constant 0 : i32
      %32 = tpu.memref_slice %arg6[%27, %c0_i32_17] : memref<16x768xf32, #tpu.memory_space<vmem>> -> memref<1x768xf32, #tpu.memory_space<vmem>>
      %33 = tpu.memref_slice %arg7[%c0_i32_15] : memref<1x!tpu.dma_semaphore, #tpu.memory_space<semaphore_mem>> -> memref<1x!tpu.dma_semaphore, #tpu.memory_space<semaphore_mem>>
      %34 = tpu.memref_squeeze %33 : memref<1x!tpu.dma_semaphore, #tpu.memory_space<semaphore_mem>> -> memref<!tpu.dma_semaphore, #tpu.memory_space<semaphore_mem>>
      tpu.enqueue_dma source(%31 : memref<1x768xf32, #tpu.memory_space<any>>) target(%32 : memref<1x768xf32, #tpu.memory_space<vmem>>) target_semaphore(%34 : memref<!tpu.dma_semaphore, #tpu.memory_space<semaphore_mem>>)
    }
    %c16_i32_1 = arith.constant 16 : i32
    %c0_i32_2 = arith.constant 0 : i32
    %c16_i32_3 = arith.constant 16 : i32
    %2 = arith.addi %c0_i32_2, %c16_i32_3 : i32
    %c1_i32_4 = arith.constant 1 : i32
    scf.for %arg8 = %c0_i32_2 to %2 step %c1_i32_4  : i32 {
      %c1_i32_13 = arith.constant 1 : i32
      %26 = arith.muli %arg8, %c1_i32_13 : i32
      %c0_i32_14 = arith.constant 0 : i32
      %27 = arith.addi %c0_i32_14, %26 : i32
      %c0_i32_15 = arith.constant 0 : i32
      %c0_i32_16 = arith.constant 0 : i32
      %c0_i32_17 = arith.constant 0 : i32
      %28 = tpu.memref_slice %arg2[%c0_i32_16, %c0_i32_17] : memref<512x768xf32, #tpu.memory_space<any>> -> memref<1x768xf32, #tpu.memory_space<any>>
      %c0_i32_18 = arith.constant 0 : i32
      %29 = tpu.memref_slice %arg6[%27, %c0_i32_18] : memref<16x768xf32, #tpu.memory_space<vmem>> -> memref<1x768xf32, #tpu.memory_space<vmem>>
      %30 = tpu.memref_slice %arg7[%c0_i32_15] : memref<1x!tpu.dma_semaphore, #tpu.memory_space<semaphore_mem>> -> memref<1x!tpu.dma_semaphore, #tpu.memory_space<semaphore_mem>>
      %31 = tpu.memref_squeeze %30 : memref<1x!tpu.dma_semaphore, #tpu.memory_space<semaphore_mem>> -> memref<!tpu.dma_semaphore, #tpu.memory_space<semaphore_mem>>
      tpu.wait_dma2 semaphore(%31 : memref<!tpu.dma_semaphore, #tpu.memory_space<semaphore_mem>>) src(%28 : memref<1x768xf32, #tpu.memory_space<any>>) dst(%29 : memref<1x768xf32, #tpu.memory_space<vmem>>)
    }
    %c16_i32_5 = arith.constant 16 : i32
    %c0 = arith.constant 0 : index
    %c0_6 = arith.constant 0 : index
    %3 = vector.load %arg6[%c0, %c0_6] : memref<16x768xf32, #tpu.memory_space<vmem>>, vector<16x768xf32>
    %c0_7 = arith.constant 0 : index
    %c0_8 = arith.constant 0 : index
    %4 = vector.load %arg3[%c0_7, %c0_8] : memref<768x3xf32, #tpu.memory_space<vmem>>, vector<768x3xf32>
    %cst = arith.constant dense<0.000000e+00> : vector<16x3xf32>
    %5 = tpu.matmul %3, %4, %cst {dimension_numbers = #tpu.dot_dimension_numbers<[1], [0], [0], [1], [0, 0, 1, 1], [], []>} : vector<16x768xf32>, vector<768x3xf32>, vector<16x3xf32> -> vector<16x3xf32>
    %c0_9 = arith.constant 0 : index
    %c0_10 = arith.constant 0 : index
    %6 = vector.load %arg4[%c0_9, %c0_10] : memref<1x3xf32, #tpu.memory_space<vmem>>, vector<1x3xf32>
    %7 = vector.broadcast %6 : vector<1x3xf32> to vector<16x3xf32>
    %8 = arith.addf %5, %7 : vector<16x3xf32>
    %9 = vector.extract_strided_slice %8 {offsets = [0, 0], sizes = [16, 1], strides = [1, 1]} : vector<16x3xf32> to vector<16x1xf32>
    %10 = vector.extract_strided_slice %8 {offsets = [0, 1], sizes = [16, 1], strides = [1, 1]} : vector<16x3xf32> to vector<16x1xf32>
    %11 = arith.maximumf %9, %10 : vector<16x1xf32>
    %12 = vector.extract_strided_slice %8 {offsets = [0, 2], sizes = [16, 1], strides = [1, 1]} : vector<16x3xf32> to vector<16x1xf32>
    %13 = arith.maximumf %11, %12 : vector<16x1xf32>
    %14 = vector.broadcast %13 : vector<16x1xf32> to vector<16x3xf32>
    %15 = arith.subf %8, %14 : vector<16x3xf32>
    %16 = math.exp %15 : vector<16x3xf32>
    %17 = vector.extract_strided_slice %16 {offsets = [0, 0], sizes = [16, 1], strides = [1, 1]} : vector<16x3xf32> to vector<16x1xf32>
    %18 = vector.extract_strided_slice %16 {offsets = [0, 1], sizes = [16, 1], strides = [1, 1]} : vector<16x3xf32> to vector<16x1xf32>
    %19 = arith.addf %17, %18 : vector<16x1xf32>
    %20 = vector.extract_strided_slice %16 {offsets = [0, 2], sizes = [16, 1], strides = [1, 1]} : vector<16x3xf32> to vector<16x1xf32>
    %21 = arith.addf %19, %20 : vector<16x1xf32>
    %22 = tpu.reciprocal %21 {approx = true} : vector<16x1xf32> -> vector<16x1xf32>
    %23 = vector.broadcast %22 : vector<16x1xf32> to vector<16x3xf32>
    %24 = arith.mulf %16, %23 : vector<16x3xf32>
    %c0_11 = arith.constant 0 : index
    %c0_12 = arith.constant 0 : index
    %25 = vector.load %arg5[%c0_11, %c0_12] : memref<16x3xf32, #tpu.memory_space<vmem>>, vector<16x3xf32>
    tpu.vector_store %arg5[%c0_11, %c0_12], %24 {strides = array<i32>} : memref<16x3xf32, #tpu.memory_space<vmem>>, vector<16x3xf32>,
    return
  }
  func.func @transform_1(%arg0: i32, %arg1: memref<16xi32, #tpu.memory_space<smem>>) -> (i32, i32) {
    %c0_i32 = arith.constant 0 : i32
    %c0_i32_0 = arith.constant 0 : i32
    %c0_i32_1 = arith.constant 0 : i32
    return %c0_i32, %c0_i32_0 : i32, i32
  }
  func.func @transform_2(%arg0: i32, %arg1: memref<16xi32, #tpu.memory_space<smem>>) -> (i32, i32) {
    %c0_i32 = arith.constant 0 : i32
    %c0_i32_0 = arith.constant 0 : i32
    %c0_i32_1 = arith.constant 0 : i32
    return %c0_i32, %c0_i32_0 : i32, i32
  }
  func.func @transform_3(%arg0: i32, %arg1: memref<16xi32, #tpu.memory_space<smem>>) -> (i32, i32) {
    %c0_i32 = arith.constant 0 : i32
    %c0_i32_0 = arith.constant 0 : i32
    return %arg0, %c0_i32 : i32, i32
  }
}

</mosaic_0001>

<llo_original>
// kernel: linear_classifier_forward.1
$region0: #{linear_classifier_forward.1}
  #allocation0 [shape = 'u32[]', space=smem, size = 0x4, offset = 0x4, fixed_abs, tag = 'smem constant byte address 0x4 - core index']
  #allocation1 [shape = 'u32[144,128]{1,0:T(1,128)}', space=vmem, size = 0x12000, scoped, tag = 'internal scratch']
  #allocation2 [shape = 'f32[16,768]{1,0:T(8,128)}', space=vmem, size = 0xc000, scoped, tag = 'scratch operand']
  #allocation3 [shape = 's32[1]{0}', space=sflag, size = 0x4, scoped, tag = 'scratch operand']
  #allocation4 [shape = 's32[1]{0}', space=sflag, size = 0x4, scoped, tag = 'scoped memory for linear_classifier_forward.1']
  #allocation5 [shape = 'u8[512]{0}', space=smem, size = 0x200, scoped, tag = 'prefetched SMEM operand 0']
  #allocation8 [shape = 's32[]', space=sflag, size = 0x4, offset = 0, fixed_abs, tag = 'sflag constant byte address 0x0 - dummy sync flag']
  %s0 = inlined_call_operand.vmem [shape: s32[16], index: 0, kind: input, shape index: {}]
  %s1 = inlined_call_operand.hbm [shape: f32[512,768], index: 1, kind: input, shape index: {}]
  %s2 = inlined_call_operand.vmem [shape: f32[768,3], index: 2, kind: input, shape index: {}]
  %s3 = inlined_call_operand.hbm [shape: f32[1,3], index: 3, kind: input, shape index: {}]
  %s4 = inlined_call_operand.vmem [shape: f32[16,3], index: 4, kind: output, shape index: {}]
  %s5 = sld [smem:[#allocation0]]
  $region36: #{linear_classifier_forward.1} parent=0
    _
  %s7 = ssub.s32 1, %s5
  %s8 = scalar_select 0, %s7, %s5
  %s9 = sshll.u32 %s0, 4
  %s10 = int_to_ptr.vmem [resolvable:$true] %s9
  %12 = dma.vmem_to_smem %s10, 16, [#allocation5], [#allocation4]
  %13 = dma.done [#allocation4], 16
  %14 = sfence
  $region1: #{linear_classifier_forward.1} parent=0
    #allocation6 [shape = 'u8[512]{0}', space=vmem, size = 0x400, scoped, tag = 'input window, operand 3, single buffered']
    #allocation7 [shape = 's32[1]{0}', space=sflag, size = 0x4, scoped, tag = 'scoped memory for linear_classifier_forward.1']
    %15 = vsyncpa [#allocation7], 0
    // Predicated region
    $region2: #{linear_classifier_forward.1} parent=1 // pred_check
      _
    $region3: #{linear_classifier_forward.1} parent=1 // pred_check_branch
      %17 = sbr.rel (0) target = $region5
    $region4: #{linear_classifier_forward.1} parent=1 // pred_region
      _
    $region5: #{linear_classifier_forward.1} parent=1 // pred_fallthru
      _
    // Predicated region
    $region6: #{linear_classifier_forward.1} parent=1 // pred_check
      _
    $region7: #{linear_classifier_forward.1} parent=1 // pred_check_branch
      %19 = sbr.rel (0) target = $region9
    $region8: #{linear_classifier_forward.1} parent=1 // pred_region
      %s21 = ssub.s32 16, 16
      %22 = vsyncadd [#allocation7], %s21
      %s24 = sshll.u32 [#allocation6], 4
      %s25 = int_to_ptr.vmem [resolvable:$true] %s24
      %27 = dma.hbm_to_vmem [thread:$0]  %s3, 16, %s25, [#allocation7]
    $region9: #{linear_classifier_forward.1} parent=1 // pred_fallthru
      _
    // Predicated region
    $region10: #{linear_classifier_forward.1} parent=1 // pred_check
      _
    $region11: #{linear_classifier_forward.1} parent=1 // pred_check_branch
      %29 = sbr.rel (0) target = $region13
    $region12: #{linear_classifier_forward.1} parent=1 // pred_region
      %30 = dma.done [#allocation7], 16
    $region13: #{linear_classifier_forward.1} parent=1 // pred_fallthru
      _
    %s31 = smul.u32 0, 16
    loop: start=0, step=1, limit=16
    $region14: #{linear_classifier_forward.1} parent=1 // loop_pre_header
      _
    $region15: #{linear_classifier_forward.1} parent=1 // loop_header
      %s33 = sphi 0, %s37
      %p34 = scmp.ge.s32.totalorder %s33, 16
    $region16: #{linear_classifier_forward.1} parent=1 // loop_header_branch
      %36 = sbr.rel (%p34) target = $region20
    $region17: #{linear_classifier_forward.1} parent=1 // loop_body
      %s38 = sadd.s32 %s31, %s33
      %s39 = sld [smem:[#allocation5 + %s38]]
      %s40 = sshrl.u32 %s39, 3
      %s41 = sand.u32 %s39, 7
      %s42 = smul.u32 %s40, 48
      %s43 = sadd.s32 %s41, %s42
      %s44 = smul.addr %s43, 16
      %s45 = scalar_lea.hbm %s1, %s44
      %s46 = sshrl.u32 %s33, 3
      %s47 = sand.u32 %s33, 7
      %s48 = smul.u32 %s46, 48
      %s49 = sadd.s32 %s47, %s48
      %s50 = scalar_lea.vmem [#allocation2], %s49
      %s52 = sshll.u32 %s50, 4
      %s53 = int_to_ptr.vmem [resolvable:$true] %s52
      %55 = dma.hbm_to_vmem [thread:$0]  %s45, 96, %s53, [#allocation3], 128, 128, 1
    $region18: #{linear_classifier_forward.1} parent=1 // loop_footer
      %s37 = sadd.s32 1, %s33
    $region19: #{linear_classifier_forward.1} parent=1 // loop_footer_branch
      %32 = sbr.rel target = $region15
    $region20: #{linear_classifier_forward.1} parent=1 // loop_exit
      _
    loop: start=0, step=1, limit=16
    $region21: #{linear_classifier_forward.1} parent=1 // loop_pre_header
      _
    $region22: #{linear_classifier_forward.1} parent=1 // loop_header
      %s57 = sphi 0, %s61
      %p58 = scmp.ge.s32.totalorder %s57, 16
    $region23: #{linear_classifier_forward.1} parent=1 // loop_header_branch
      %60 = sbr.rel (%p58) target = $region27
    $region24: #{linear_classifier_forward.1} parent=1 // loop_body
      %s62 = smul.u32 1, 6
      %s63 = sshll.u32 %s62, 4
      %64 = dma.done [#allocation3], %s63
    $region25: #{linear_classifier_forward.1} parent=1 // loop_footer
      %s61 = sadd.s32 1, %s57
    $region26: #{linear_classifier_forward.1} parent=1 // loop_footer_branch
      %56 = sbr.rel target = $region22
    $region27: #{linear_classifier_forward.1} parent=1 // loop_exit
      _
    %v65 = vld [vmem:[#allocation2] sm:$0xff]
    %v66 = vld [vmem:[#allocation2 + $0x8] sm:$0xff]
    %v67 = vld [vmem:[#allocation2 + $0x10] sm:$0xff]
    %v68 = vld [vmem:[#allocation2 + $0x18] sm:$0xff]
    %v69 = vld [vmem:[#allocation2 + $0x20] sm:$0xff]
    %v70 = vld [vmem:[#allocation2 + $0x28] sm:$0xff]
    %v71 = vld [vmem:[#allocation2 + $0x30] sm:$0xff]
    %v72 = vld [vmem:[#allocation2 + $0x38] sm:$0xff]
    %v73 = vld [vmem:[#allocation2 + $0x40] sm:$0xff]
    %v74 = vld [vmem:[#allocation2 + $0x48] sm:$0xff]
    %v75 = vld [vmem:[#allocation2 + $0x50] sm:$0xff]
    %v76 = vld [vmem:[#allocation2 + $0x58] sm:$0xff]
    %v77 = vld [vmem:[%s2] sm:$0xff]
    %v78 = vld [vmem:[%s2 + $0x8] sm:$0xff]
    %v79 = vld [vmem:[%s2 + $0x10] sm:$0xff]
    %v80 = vld [vmem:[%s2 + $0x18] sm:$0xff]
    %v81 = vld [vmem:[%s2 + $0x20] sm:$0xff]
    %v82 = vld [vmem:[%s2 + $0x28] sm:$0xff]
    %v83 = vld [vmem:[%s2 + $0x30] sm:$0xff]
    %v84 = vld [vmem:[%s2 + $0x38] sm:$0xff]
    %v85 = vld [vmem:[%s2 + $0x40] sm:$0xff]
    %v86 = vld [vmem:[%s2 + $0x48] sm:$0xff]
    %v87 = vld [vmem:[%s2 + $0x50] sm:$0xff]
    %v88 = vld [vmem:[%s2 + $0x58] sm:$0xff]
    %v89 = vld [vmem:[%s2 + $0x60] sm:$0xff]
    %v90 = vld [vmem:[%s2 + $0x68] sm:$0xff]
    %v91 = vld [vmem:[%s2 + $0x70] sm:$0xff]
    %v92 = vld [vmem:[%s2 + $0x78] sm:$0xff]
    %v93 = vld [vmem:[%s2 + $0x80] sm:$0xff]
    %v94 = vld [vmem:[%s2 + $0x88] sm:$0xff]
    %v95 = vld [vmem:[%s2 + $0x90] sm:$0xff]
    %v96 = vld [vmem:[%s2 + $0x98] sm:$0xff]
    %v97 = vld [vmem:[%s2 + $0xa0] sm:$0xff]
    %v98 = vld [vmem:[%s2 + $0xa8] sm:$0xff]
    %v99 = vld [vmem:[%s2 + $0xb0] sm:$0xff]
    %v100 = vld [vmem:[%s2 + $0xb8] sm:$0xff]
    %v101 = vld [vmem:[%s2 + $0xc0] sm:$0xff]
    %v102 = vld [vmem:[%s2 + $0xc8] sm:$0xff]
    %v103 = vld [vmem:[%s2 + $0xd0] sm:$0xff]
    %v104 = vld [vmem:[%s2 + $0xd8] sm:$0xff]
    %v105 = vld [vmem:[%s2 + $0xe0] sm:$0xff]
    %v106 = vld [vmem:[%s2 + $0xe8] sm:$0xff]
    %v107 = vld [vmem:[%s2 + $0xf0] sm:$0xff]
    %v108 = vld [vmem:[%s2 + $0xf8] sm:$0xff]
    %v109 = vld [vmem:[%s2 + $0x100] sm:$0xff]
    %v110 = vld [vmem:[%s2 + $0x108] sm:$0xff]
    %v111 = vld [vmem:[%s2 + $0x110] sm:$0xff]
    %v112 = vld [vmem:[%s2 + $0x118] sm:$0xff]
    %v113 = vld [vmem:[%s2 + $0x120] sm:$0xff]
    %v114 = vld [vmem:[%s2 + $0x128] sm:$0xff]
    %v115 = vld [vmem:[%s2 + $0x130] sm:$0xff]
    %v116 = vld [vmem:[%s2 + $0x138] sm:$0xff]
    %v117 = vld [vmem:[%s2 + $0x140] sm:$0xff]
    %v118 = vld [vmem:[%s2 + $0x148] sm:$0xff]
    %v119 = vld [vmem:[%s2 + $0x150] sm:$0xff]
    %v120 = vld [vmem:[%s2 + $0x158] sm:$0xff]
    %v121 = vld [vmem:[%s2 + $0x160] sm:$0xff]
    %v122 = vld [vmem:[%s2 + $0x168] sm:$0xff]
    %v123 = vld [vmem:[%s2 + $0x170] sm:$0xff]
    %v124 = vld [vmem:[%s2 + $0x178] sm:$0xff]
    %v125 = vld [vmem:[%s2 + $0x180] sm:$0xff]
    %v126 = vld [vmem:[%s2 + $0x188] sm:$0xff]
    %v127 = vld [vmem:[%s2 + $0x190] sm:$0xff]
    %v128 = vld [vmem:[%s2 + $0x198] sm:$0xff]
    %v129 = vld [vmem:[%s2 + $0x1a0] sm:$0xff]
    %v130 = vld [vmem:[%s2 + $0x1a8] sm:$0xff]
    %v131 = vld [vmem:[%s2 + $0x1b0] sm:$0xff]
    %v132 = vld [vmem:[%s2 + $0x1b8] sm:$0xff]
    %v133 = vld [vmem:[%s2 + $0x1c0] sm:$0xff]
    %v134 = vld [vmem:[%s2 + $0x1c8] sm:$0xff]
    %v135 = vld [vmem:[%s2 + $0x1d0] sm:$0xff]
    %v136 = vld [vmem:[%s2 + $0x1d8] sm:$0xff]
    %v137 = vld [vmem:[%s2 + $0x1e0] sm:$0xff]
    %v138 = vld [vmem:[%s2 + $0x1e8] sm:$0xff]
    %v139 = vld [vmem:[%s2 + $0x1f0] sm:$0xff]
    %v140 = vld [vmem:[%s2 + $0x1f8] sm:$0xff]
    %v141 = vld [vmem:[%s2 + $0x200] sm:$0xff]
    %v142 = vld [vmem:[%s2 + $0x208] sm:$0xff]
    %v143 = vld [vmem:[%s2 + $0x210] sm:$0xff]
    %v144 = vld [vmem:[%s2 + $0x218] sm:$0xff]
    %v145 = vld [vmem:[%s2 + $0x220] sm:$0xff]
    %v146 = vld [vmem:[%s2 + $0x228] sm:$0xff]
    %v147 = vld [vmem:[%s2 + $0x230] sm:$0xff]
    %v148 = vld [vmem:[%s2 + $0x238] sm:$0xff]
    %v149 = vld [vmem:[%s2 + $0x240] sm:$0xff]
    %v150 = vld [vmem:[%s2 + $0x248] sm:$0xff]
    %v151 = vld [vmem:[%s2 + $0x250] sm:$0xff]
    %v152 = vld [vmem:[%s2 + $0x258] sm:$0xff]
    %v153 = vld [vmem:[%s2 + $0x260] sm:$0xff]
    %v154 = vld [vmem:[%s2 + $0x268] sm:$0xff]
    %v155 = vld [vmem:[%s2 + $0x270] sm:$0xff]
    %v156 = vld [vmem:[%s2 + $0x278] sm:$0xff]
    %v157 = vld [vmem:[%s2 + $0x280] sm:$0xff]
    %v158 = vld [vmem:[%s2 + $0x288] sm:$0xff]
    %v159 = vld [vmem:[%s2 + $0x290] sm:$0xff]
    %v160 = vld [vmem:[%s2 + $0x298] sm:$0xff]
    %v161 = vld [vmem:[%s2 + $0x2a0] sm:$0xff]
    %v162 = vld [vmem:[%s2 + $0x2a8] sm:$0xff]
    %v163 = vld [vmem:[%s2 + $0x2b0] sm:$0xff]
    %v164 = vld [vmem:[%s2 + $0x2b8] sm:$0xff]
    %v165 = vld [vmem:[%s2 + $0x2c0] sm:$0xff]
    %v166 = vld [vmem:[%s2 + $0x2c8] sm:$0xff]
    %v167 = vld [vmem:[%s2 + $0x2d0] sm:$0xff]
    %v168 = vld [vmem:[%s2 + $0x2d8] sm:$0xff]
    %v169 = vld [vmem:[%s2 + $0x2e0] sm:$0xff]
    %v170 = vld [vmem:[%s2 + $0x2e8] sm:$0xff]
    %v171 = vld [vmem:[%s2 + $0x2f0] sm:$0xff]
    %v172 = vld [vmem:[%s2 + $0x2f8] sm:$0xff]
    %v173 = vld [vmem:[#allocation6] sm:$0x1]
    %v175 = vlaneseq
    %v176 = vshrl.u32 %v175, 7
    %v177 = vsub.s32 0, %v176
    %v178 = vrot.slane %v173, %v177
    %180 = vmatprep.subr.mxu0 0.0
    %181 = vmatpush1.msra.mxu0 %v92
    %182 = vmatprep.subr.mxu0 0.0
    %183 = vmatpush1.msra.mxu0 %v91
    %184 = vmatprep.subr.mxu0 0.0
    %185 = vmatpush1.msra.mxu0 %v90
    %186 = vmatprep.subr.mxu0 0.0
    %187 = vmatpush1.msra.mxu0 %v89
    %188 = vmatprep.subr.mxu0 0.0
    %189 = vmatpush1.msra.mxu0 %v88
    %190 = vmatprep.subr.mxu0 0.0
    %191 = vmatpush1.msra.mxu0 %v87
    %192 = vmatprep.subr.mxu0 0.0
    %193 = vmatpush1.msra.mxu0 %v86
    %194 = vmatprep.subr.mxu0 0.0
    %195 = vmatpush1.msra.mxu0 %v85
    %196 = vmatprep.subr.mxu0 0.0
    %197 = vmatpush1.msra.mxu0 %v84
    %198 = vmatprep.subr.mxu0 0.0
    %199 = vmatpush1.msra.mxu0 %v83
    %200 = vmatprep.subr.mxu0 0.0
    %201 = vmatpush1.msra.mxu0 %v82
    %202 = vmatprep.subr.mxu0 0.0
    %203 = vmatpush1.msra.mxu0 %v81
    %204 = vmatprep.subr.mxu0 0.0
    %205 = vmatpush1.msra.mxu0 %v80
    %206 = vmatprep.subr.mxu0 0.0
    %207 = vmatpush1.msra.mxu0 %v79
    %208 = vmatprep.subr.mxu0 0.0
    %209 = vmatpush1.msra.mxu0 %v78
    %210 = vmatprep.subr.mxu0 0.0
    %211 = vmatpush1.msra.mxu0 %v77
    %212 = vmatprep.subr.mxu0 0.0
    %213 = vmatpush2.msra.mxu0 %v108
    %214 = vmatprep.subr.mxu0 0.0
    %215 = vmatpush2.msra.mxu0 %v107
    %216 = vmatprep.subr.mxu0 0.0
    %217 = vmatpush2.msra.mxu0 %v106
    %218 = vmatprep.subr.mxu0 0.0
    %219 = vmatpush2.msra.mxu0 %v105
    %220 = vmatprep.subr.mxu0 0.0
    %221 = vmatpush2.msra.mxu0 %v104
    %222 = vmatprep.subr.mxu0 0.0
    %223 = vmatpush2.msra.mxu0 %v103
    %224 = vmatprep.subr.mxu0 0.0
    %225 = vmatpush2.msra.mxu0 %v102
    %226 = vmatprep.subr.mxu0 0.0
    %227 = vmatpush2.msra.mxu0 %v101
    %228 = vmatprep.subr.mxu0 0.0
    %229 = vmatpush2.msra.mxu0 %v100
    %230 = vmatprep.subr.mxu0 0.0
    %231 = vmatpush2.msra.mxu0 %v99
    %232 = vmatprep.subr.mxu0 0.0
    %233 = vmatpush2.msra.mxu0 %v98
    %234 = vmatprep.subr.mxu0 0.0
    %235 = vmatpush2.msra.mxu0 %v97
    %236 = vmatprep.subr.mxu0 0.0
    %237 = vmatpush2.msra.mxu0 %v96
    %238 = vmatprep.subr.mxu0 0.0
    %239 = vmatpush2.msra.mxu0 %v95
    %240 = vmatprep.subr.mxu0 0.0
    %241 = vmatpush2.msra.mxu0 %v94
    %242 = vmatprep.subr.mxu0 0.0
    %243 = vmatpush2.msra.mxu0 %v93
    %244 = vmatprep.mubr.f32.mxu0 %v66
    %245 = vmatmul.mubr.f32.gmra.mxu0 %v65
    %v246 = vpop.f32.mrf.mxu0
    %v247 = vadd.f32 %v178, %v246
    %v248 = vpop.f32.mrf.mxu0
    %249 = vmatprep.mubr.f32.mxu0 %v72
    %250 = vmatmul.mubr.f32.gmra.mxu0 %v71
    %v251 = vpop.f32.mrf.mxu0
    %v252 = vadd.f32 %v178, %v251
    %v253 = vpop.f32.mrf.mxu0
    %254 = vdwg.mxu0
    %255 = vmatprep.subr.mxu0 0.0
    %256 = vmatpush1.msra.mxu0 %v124
    %257 = vmatprep.subr.mxu0 0.0
    %258 = vmatpush1.msra.mxu0 %v123
    %259 = vmatprep.subr.mxu0 0.0
    %260 = vmatpush1.msra.mxu0 %v122
    %261 = vmatprep.subr.mxu0 0.0
    %262 = vmatpush1.msra.mxu0 %v121
    %263 = vmatprep.subr.mxu0 0.0
    %264 = vmatpush1.msra.mxu0 %v120
    %265 = vmatprep.subr.mxu0 0.0
    %266 = vmatpush1.msra.mxu0 %v119
    %267 = vmatprep.subr.mxu0 0.0
    %268 = vmatpush1.msra.mxu0 %v118
    %269 = vmatprep.subr.mxu0 0.0
    %270 = vmatpush1.msra.mxu0 %v117
    %271 = vmatprep.subr.mxu0 0.0
    %272 = vmatpush1.msra.mxu0 %v116
    %273 = vmatprep.subr.mxu0 0.0
    %274 = vmatpush1.msra.mxu0 %v115
    %275 = vmatprep.subr.mxu0 0.0
    %276 = vmatpush1.msra.mxu0 %v114
    %277 = vmatprep.subr.mxu0 0.0
    %278 = vmatpush1.msra.mxu0 %v113
    %279 = vmatprep.subr.mxu0 0.0
    %280 = vmatpush1.msra.mxu0 %v112
    %281 = vmatprep.subr.mxu0 0.0
    %282 = vmatpush1.msra.mxu0 %v111
    %283 = vmatprep.subr.mxu0 0.0
    %284 = vmatpush1.msra.mxu0 %v110
    %285 = vmatprep.subr.mxu0 0.0
    %286 = vmatpush1.msra.mxu0 %v109
    %287 = vmatprep.subr.mxu0 0.0
    %288 = vmatpush2.msra.mxu0 %v140
    %289 = vmatprep.subr.mxu0 0.0
    %290 = vmatpush2.msra.mxu0 %v139
    %291 = vmatprep.subr.mxu0 0.0
    %292 = vmatpush2.msra.mxu0 %v138
    %293 = vmatprep.subr.mxu0 0.0
    %294 = vmatpush2.msra.mxu0 %v137
    %295 = vmatprep.subr.mxu0 0.0
    %296 = vmatpush2.msra.mxu0 %v136
    %297 = vmatprep.subr.mxu0 0.0
    %298 = vmatpush2.msra.mxu0 %v135
    %299 = vmatprep.subr.mxu0 0.0
    %300 = vmatpush2.msra.mxu0 %v134
    %301 = vmatprep.subr.mxu0 0.0
    %302 = vmatpush2.msra.mxu0 %v133
    %303 = vmatprep.subr.mxu0 0.0
    %304 = vmatpush2.msra.mxu0 %v132
    %305 = vmatprep.subr.mxu0 0.0
    %306 = vmatpush2.msra.mxu0 %v131
    %307 = vmatprep.subr.mxu0 0.0
    %308 = vmatpush2.msra.mxu0 %v130
    %309 = vmatprep.subr.mxu0 0.0
    %310 = vmatpush2.msra.mxu0 %v129
    %311 = vmatprep.subr.mxu0 0.0
    %312 = vmatpush2.msra.mxu0 %v128
    %313 = vmatprep.subr.mxu0 0.0
    %314 = vmatpush2.msra.mxu0 %v127
    %315 = vmatprep.subr.mxu0 0.0
    %316 = vmatpush2.msra.mxu0 %v126
    %317 = vmatprep.subr.mxu0 0.0
    %318 = vmatpush2.msra.mxu0 %v125
    %319 = vmatprep.mubr.f32.mxu0 %v68
    %320 = vmatmul.mubr.f32.gmra.mxu0 %v67
    %v321 = vpop.f32.mrf.mxu0
    %v322 = vadd.f32 %v247, %v321
    %v323 = vpop.f32.mrf.mxu0
    %324 = vmatprep.mubr.f32.mxu0 %v74
    %325 = vmatmul.mubr.f32.gmra.mxu0 %v73
    %v326 = vpop.f32.mrf.mxu0
    %v327 = vadd.f32 %v252, %v326
    %v328 = vpop.f32.mrf.mxu0
    %329 = vdwg.mxu0
    %330 = vmatprep.subr.mxu0 0.0
    %331 = vmatpush1.msra.mxu0 %v156
    %332 = vmatprep.subr.mxu0 0.0
    %333 = vmatpush1.msra.mxu0 %v155
    %334 = vmatprep.subr.mxu0 0.0
    %335 = vmatpush1.msra.mxu0 %v154
    %336 = vmatprep.subr.mxu0 0.0
    %337 = vmatpush1.msra.mxu0 %v153
    %338 = vmatprep.subr.mxu0 0.0
    %339 = vmatpush1.msra.mxu0 %v152
    %340 = vmatprep.subr.mxu0 0.0
    %341 = vmatpush1.msra.mxu0 %v151
    %342 = vmatprep.subr.mxu0 0.0
    %343 = vmatpush1.msra.mxu0 %v150
    %344 = vmatprep.subr.mxu0 0.0
    %345 = vmatpush1.msra.mxu0 %v149
    %346 = vmatprep.subr.mxu0 0.0
    %347 = vmatpush1.msra.mxu0 %v148
    %348 = vmatprep.subr.mxu0 0.0
    %349 = vmatpush1.msra.mxu0 %v147
    %350 = vmatprep.subr.mxu0 0.0
    %351 = vmatpush1.msra.mxu0 %v146
    %352 = vmatprep.subr.mxu0 0.0
    %353 = vmatpush1.msra.mxu0 %v145
    %354 = vmatprep.subr.mxu0 0.0
    %355 = vmatpush1.msra.mxu0 %v144
    %356 = vmatprep.subr.mxu0 0.0
    %357 = vmatpush1.msra.mxu0 %v143
    %358 = vmatprep.subr.mxu0 0.0
    %359 = vmatpush1.msra.mxu0 %v142
    %360 = vmatprep.subr.mxu0 0.0
    %361 = vmatpush1.msra.mxu0 %v141
    %362 = vmatprep.subr.mxu0 0.0
    %363 = vmatpush2.msra.mxu0 %v172
    %364 = vmatprep.subr.mxu0 0.0
    %365 = vmatpush2.msra.mxu0 %v171
    %366 = vmatprep.subr.mxu0 0.0
    %367 = vmatpush2.msra.mxu0 %v170
    %368 = vmatprep.subr.mxu0 0.0
    %369 = vmatpush2.msra.mxu0 %v169
    %370 = vmatprep.subr.mxu0 0.0
    %371 = vmatpush2.msra.mxu0 %v168
    %372 = vmatprep.subr.mxu0 0.0
    %373 = vmatpush2.msra.mxu0 %v167
    %374 = vmatprep.subr.mxu0 0.0
    %375 = vmatpush2.msra.mxu0 %v166
    %376 = vmatprep.subr.mxu0 0.0
    %377 = vmatpush2.msra.mxu0 %v165
    %378 = vmatprep.subr.mxu0 0.0
    %379 = vmatpush2.msra.mxu0 %v164
    %380 = vmatprep.subr.mxu0 0.0
    %381 = vmatpush2.msra.mxu0 %v163
    %382 = vmatprep.subr.mxu0 0.0
    %383 = vmatpush2.msra.mxu0 %v162
    %384 = vmatprep.subr.mxu0 0.0
    %385 = vmatpush2.msra.mxu0 %v161
    %386 = vmatprep.subr.mxu0 0.0
    %387 = vmatpush2.msra.mxu0 %v160
    %388 = vmatprep.subr.mxu0 0.0
    %389 = vmatpush2.msra.mxu0 %v159
    %390 = vmatprep.subr.mxu0 0.0
    %391 = vmatpush2.msra.mxu0 %v158
    %392 = vmatprep.subr.mxu0 0.0
    %393 = vmatpush2.msra.mxu0 %v157
    %394 = vmatprep.mubr.f32.mxu0 %v70
    %395 = vmatmul.mubr.f32.gmra.mxu0 %v69
    %v396 = vpop.f32.mrf.mxu0
    %v397 = vadd.f32 %v322, %v396
    %v398 = vpop.f32.mrf.mxu0
    %399 = vmatprep.mubr.f32.mxu0 %v76
    %400 = vmatmul.mubr.f32.gmra.mxu0 %v75
    %v401 = vpop.f32.mrf.mxu0
    %v402 = vadd.f32 %v327, %v401
    %v403 = vpop.f32.mrf.mxu0
    %404 = vdwg.mxu0
    %407 = vrot.lane.b32.xlu0 %v397, 127
    %v408 = vpop.permute.xlu0 %407
    %409 = vrot.lane.b32.xlu0 %v402, 127
    %v410 = vpop.permute.xlu0 %409
    %v413 = vmax.f32 %v397, %v408
    %v414 = vmax.f32 %v402, %v410
    %415 = vrot.lane.b32.xlu0 %v397, 126
    %v416 = vpop.permute.xlu0 %415
    %417 = vrot.lane.b32.xlu0 %v402, 126
    %v418 = vpop.permute.xlu0 %417
    %v421 = vmax.f32 %v413, %v416
    %v422 = vmax.f32 %v414, %v418
    %424 = vset.pattern.permute.xlu0 0
    %425 = vperm.xlu0 %424, %v421
    %v426 = vpop.permute.xlu0 %425
    %429 = vset.pattern.permute.xlu0 0
    %430 = vperm.xlu0 %429, %v422
    %v431 = vpop.permute.xlu0 %430
    %v433 = vsub.f32 %v397, %v426
    %v434 = vsub.f32 %v402, %v431
    %v435 = vmul.f32 %v433, 1.442695
    %v436 = vpow.pop %v435
    %v437 = vmul.f32 %v434, 1.442695
    %v438 = vpow.pop %v437
    %441 = vrot.lane.b32.xlu0 %v436, 127
    %v442 = vpop.permute.xlu0 %441
    %443 = vrot.lane.b32.xlu0 %v438, 127
    %v444 = vpop.permute.xlu0 %443
    %v447 = vadd.f32 %v436, %v442
    %v448 = vadd.f32 %v438, %v444
    %449 = vrot.lane.b32.xlu0 %v436, 126
    %v450 = vpop.permute.xlu0 %449
    %451 = vrot.lane.b32.xlu0 %v438, 126
    %v452 = vpop.permute.xlu0 %451
    %v455 = vadd.f32 %v447, %v450
    %v456 = vadd.f32 %v448, %v452
    %v457 = vrcp.pop %v455
    %v458 = vrcp.pop %v456
    %460 = vset.pattern.permute.xlu0 0
    %461 = vperm.xlu0 %460, %v457
    %v462 = vpop.permute.xlu0 %461
    %465 = vset.pattern.permute.xlu0 0
    %466 = vperm.xlu0 %465, %v458
    %v467 = vpop.permute.xlu0 %466
    %v469 = vmul.f32 %v436, %v462
    %v470 = vmul.f32 %v438, %v467
    %vm471 = vcmask 23552
    %472 = vst.msk [vmem:[%s4] sm:$0xff] %vm471, %v469
    %473 = vst.msk [vmem:[%s4 + $0x8] sm:$0xff] %vm471, %v470
    // Predicated region
    $region28: #{linear_classifier_forward.1} parent=1 // pred_check
      _
    $region29: #{linear_classifier_forward.1} parent=1 // pred_check_branch
      %475 = sbr.rel (0) target = $region31
    $region30: #{linear_classifier_forward.1} parent=1 // pred_region
      _
    $region31: #{linear_classifier_forward.1} parent=1 // pred_fallthru
      _
    // Predicated region
    $region32: #{linear_classifier_forward.1} parent=1 // pred_check
      _
    $region33: #{linear_classifier_forward.1} parent=1 // pred_check_branch
      %477 = sbr.rel (0) target = $region35
    $region34: #{linear_classifier_forward.1} parent=1 // pred_region
      _
    $region35: #{linear_classifier_forward.1} parent=1 // pred_fallthru
      _
    %478 = vsyncpa [#allocation7], 1
  %479 = vsyncmov [#allocation3]
  %s480 = vpop.sfrf %479
  %p481 = scmp.eq.s32.totalorder %s480, 0
  %p482 = pneg %p481
  %484 = shalt.err (%p482)

</llo_original>
